<compile_context>
chip_gen: v6e
topology: v6e:2x2x1
jax: 0.10.0
libtpu: 0.0.40
codegen_flags: <defaults>
</compile_context>

<pallas_src>
import functools
import math

import numpy as np
import jax
import jax.numpy as jnp
from jax.experimental import pallas as pl
from jax.experimental.pallas import tpu as pltpu


# ------------------------------------------------------------------ parameter init
def init_conv_weight(hw, n_div, kernel_size, block_position="start", init_strategy=3):
    """Deterministic replication of init_conv / init_conv_for_others (channel_enhance=2)."""
    fold = hw // n_div
    mid = math.floor(kernel_size / 2)
    if block_position == "start":
        i = 0
    elif block_position == "middle":
        i = int(n_div // 2 - 1)
    elif block_position == "end":
        i = n_div - 2
    else:
        # TODO(synk): 'stochastic' block_position uses np.random.choice (non-deterministic) - not replicated.
        raise ValueError("only deterministic block positions supported here")
    w = np.zeros((hw, kernel_size), np.float32)  # PyTorch weight is (hw, 1, K); group dim squeezed
    if i * fold != 0:
        w[: i * fold, mid] = 1.0
    if (i + 2) * fold < hw:
        w[(i + 2) * fold :, mid] = 1.0
    if init_strategy == 1:
        w[i * fold : (i + 2) * fold, :] = 1.0
    elif init_strategy == 3:
        w[i * fold : (i + 1) * fold, mid + 1] = 1.0
        w[(i + 1) * fold : (i + 2) * fold, mid - 1] = 1.0
    # TODO(synk): init_strategy == 2 (kaiming_uniform_) intentionally not replicated: non-deterministic.
    return jnp.asarray(w), i, fold


# ------------------------------------------------------------------ Pallas kernel
def _enhance_kernel(x_ref, w_ref, o_ref, *, kernel_size):
    # x_ref : (C, TL)  one batch element, one lane tile (native layout, HW on lanes)
    # w_ref : (K, TL)  per-lane depthwise taps; residual already folded into center tap
    # o_ref : (C, TL)
    x = x_ref[...].astype(jnp.float32)     # compute in f32 (bf16 I/O supported)
    w = w_ref[...]
    c, n_lanes = x.shape
    pad = kernel_size // 2

    # Center tap (includes the folded residual): lane-vector weight broadcast over rows.
    acc = w[pad : pad + 1, :] * x

    # Off-center taps, UNMASKED: one XLU roll + mul + add per tap (no full-block
    # iota/compare/select).  The roll is circular within the batch element; the |s|
    # wrapped rows per tap are fixed up below.
    for j in range(kernel_size):
        s = j - pad
        if s == 0:
            continue
        shifted = pltpu.roll(x, shift=(-s) % c, axis=0)   # shifted[r] == x[(r + s) % c]
        acc = acc + w[j : j + 1, :] * shifted

    o_ref[...] = acc.astype(o_ref.dtype)

    # Zero-padding fix-up: subtract the circularly wrapped contributions.  Only the
    # first / last `pad` rows are touched — tiny (pad, TL) slices, not full-block VPU work.
    if pad > 0:
        top_segs, bot_segs = [], []
        for m in range(1, pad + 1):
            # tap s=-m: invalid dest rows r < m, spurious source x[c-m+r]
            seg_t = w[pad - m : pad - m + 1, :] * x[c - m : c, :]        # rows 0..m-1
            if m < pad:
                seg_t = jnp.concatenate(
                    [seg_t, jnp.zeros((pad - m, n_lanes), jnp.float32)], axis=0)
            top_segs.append(seg_t)
            # tap s=+m: invalid dest rows r >= c-m, spurious source x[r+m-c]
            seg_b = w[pad + m : pad + m + 1, :] * x[0:m, :]              # rows pad-m..pad-1
            if m < pad:
                seg_b = jnp.concatenate(
                    [jnp.zeros((pad - m, n_lanes), jnp.float32), seg_b], axis=0)
            bot_segs.append(seg_b)
        corr_top = functools.reduce(lambda a, b: a + b, top_segs)
        corr_bot = functools.reduce(lambda a, b: a + b, bot_segs)
        o_ref[0:pad, :] = (acc[0:pad, :] - corr_top).astype(o_ref.dtype)
        o_ref[c - pad : c, :] = (acc[c - pad : c, :] - corr_bot).astype(o_ref.dtype)


# ------------------------------------------------------------------ sizing helpers
def _vmem_budgets():
    """(target x-block bytes, vmem_limit_bytes), derived from physical VMEM per generation."""
    try:
        phys = int(getattr(pltpu.get_tpu_info(), "vmem_capacity_bytes", 0))
    except Exception:
        phys = 0
    if phys >= 128 * 1024 * 1024:                  # v5e / v6e class: 128 MiB VMEM, 1 TC
        return 2 * 1024 * 1024, 96 * 1024 * 1024
    return 1 * 1024 * 1024, 48 * 1024 * 1024       # v7x class (64 MiB VMEM, 2 TCs) or unknown


def _pick_lane_tile(hwp, c, itemsize, target_bytes, batch):
    """Largest lane tile (multiple of 128 dividing hwp) whose x-block fits the budget,
    then shrink (while blocks stay >= 256 KiB) until there are >= 4 grid steps for
    pipelining depth / v7x megacore."""
    cands = [t for t in range(128, hwp + 1, 128) if hwp % t == 0] or [hwp]
    fits = [t for t in cands if c * t * itemsize <= target_bytes] or [min(cands)]
    tl = max(fits)
    while batch * (hwp // tl) < 4:
        smaller = [t for t in fits if t < tl and c * t * itemsize >= 256 * 1024]
        if not smaller:
            break
        tl = max(smaller)
    return tl


# ------------------------------------------------------------------ wrapper
@functools.partial(jax.jit, static_argnames=("i", "fold", "kernel_size"))
def channel_enhance_2(x, weight, *, i, fold, kernel_size):
    """x: (B, C, H, W) NCHW (f32 or bf16), weight: (HW, K). Same-shape output (net == identity)."""
    bs, c, h, w_sp = x.shape
    hw = h * w_sp
    pad = kernel_size // 2
    assert 2 * pad <= c, "conv taps must fit inside the channel dimension"

    # Fold the residual (identity at HW positions [i*fold, (i+2)*fold)) into the center tap.
    lo, hi = i * fold, (i + 2) * fold
    w_eff = weight.astype(jnp.float32).at[lo:hi, pad].add(1.0)       # (HW, K)
    w_eff = jnp.transpose(w_eff, (1, 0))                             # (K, HW), lane axis last

    # Native layout (free reshape) + lane-dense padding of HW to a multiple of 128.
    x3 = x.reshape(bs, c, hw)
    hwp = ((hw + 127) // 128) * 128
    if hwp != hw:
        x3 = jnp.pad(x3, ((0, 0), (0, 0), (0, hwp - hw)))
        w_eff = jnp.pad(w_eff, ((0, 0), (0, hwp - hw)))

    target_blk, vmem_limit = _vmem_budgets()
    tl = _pick_lane_tile(hwp, c, x.dtype.itemsize, target_blk, bs)
    grid = (hwp // tl, bs)    # batch innermost -> (K, TL) weight block stays resident per lane tile

    kern = functools.partial(_enhance_kernel, kernel_size=kernel_size)
    out3 = pl.pallas_call(
        kern,
        out_shape=jax.ShapeDtypeStruct((bs, c, hwp), x.dtype),
        grid_spec=pltpu.PrefetchScalarGridSpec(
            num_scalar_prefetch=0,
            grid=grid,
            in_specs=[
                pl.BlockSpec((None, c, tl), lambda l, b: (b, 0, l)),        # x block (batch squeezed)
                pl.BlockSpec((kernel_size, tl), lambda l, b: (0, l)),       # resident weight
            ],
            out_specs=pl.BlockSpec((None, c, tl), lambda l, b: (b, 0, l)),
        ),
        input_output_aliases={0: 0},      # overwrite x3 in place: same shape/dtype, block read-before-write
        compiler_params=pltpu.CompilerParams(
            dimension_semantics=("parallel", "parallel"),
            vmem_limit_bytes=vmem_limit,
        ),
    )(x3, w_eff)

    if hwp != hw:
        out3 = out3[..., :hw]
    return out3.reshape(bs, c, h, w_sp)  # TODO(synk): self.net applied afterwards; treated as identity here.


# ------------------------------------------------------------------ pure-JAX reference (unfused)
def reference(x, weight, *, i, fold, kernel_size):
    bs, c, h, w_sp = x.shape
    hw = h * w_sp
    y = jnp.transpose(x.reshape(bs, c, hw), (0, 2, 1))  # (B, HW, C), as in the PyTorch module
    pad = kernel_size // 2
    yp = jnp.pad(y, ((0, 0), (0, 0), (pad, pad)))
    out = jnp.zeros_like(y)
    for j in range(kernel_size):
        out = out + weight[:, j][None, :, None] * yp[:, :, j : j + c]
    lo, hi = i * fold, (i + 2) * fold
    out = out.at[:, lo:hi, :].add(y[:, lo:hi, :])
    return jnp.transpose(out, (0, 2, 1)).reshape(bs, c, h, w_sp)


# ------------------------------------------------------------------ main
if __name__ == "__main__":
    # Small but layout-friendly shapes: HW = 16*16 = 256 (lane-dense), C = 32.
    B, C, H, W = 2, 32, 16, 16
    n_div = 4
    kernel_size = 3
    block_position = "start"
    init_strategy = 3

    hw = H * W
    weight, i_pos, fold = init_conv_weight(hw, n_div, kernel_size, block_position, init_strategy)

    key = jax.random.PRNGKey(0)
    x = jax.random.normal(key, (B, C, H, W), dtype=jnp.float32)

    ref = reference(x, weight, i=i_pos, fold=fold, kernel_size=kernel_size)

    out = channel_enhance_2(x, weight, i=i_pos, fold=fold, kernel_size=kernel_size)
    out = jax.block_until_ready(out)

    np.testing.assert_allclose(np.asarray(out), np.asarray(ref), rtol=1e-5, atol=1e-5)

    print("KERNEL_OK")
</pallas_src>

<mosaic_0001>
module attributes {stable_mosaic.version = 11 : i64} {
  func.func @_enhance_kernel(%arg0: i32, %arg1: i32, %arg2: memref<1x32x256xf32, #tpu.memory_space<vmem>>, %arg3: memref<3x256xf32, #tpu.memory_space<vmem>>, %arg4: memref<1x32x256xf32, #tpu.memory_space<vmem>>) attributes {dimension_semantics = [#tpu.dimension_semantics<parallel>, #tpu.dimension_semantics<parallel>], iteration_bounds = array<i64: 1, 2>, scalar_prefetch = 0 : i64, scratch_operands = 0 : i64, tpu.core_type = #tpu.core_type<tc>, window_params = [{transform_indices = @transform_0, window_bounds = array<i64: 1, 32, 256>}, {transform_indices = @transform_1, window_bounds = array<i64: 3, 256>}, {transform_indices = @transform_2, window_bounds = array<i64: 1, 32, 256>}]} {
    %c0 = arith.constant 0 : index
    %c0_0 = arith.constant 0 : index
    %c0_1 = arith.constant 0 : index
    %0 = vector.load %arg2[%c0, %c0_0, %c0_1] : memref<1x32x256xf32, #tpu.memory_space<vmem>>, vector<1x32x256xf32>
    %1 = vector.shape_cast %0 : vector<1x32x256xf32> to vector<32x256xf32>
    %c0_2 = arith.constant 0 : index
    %c0_3 = arith.constant 0 : index
    %2 = vector.load %arg3[%c0_2, %c0_3] : memref<3x256xf32, #tpu.memory_space<vmem>>, vector<3x256xf32>
    %3 = vector.extract_strided_slice %2 {offsets = [1, 0], sizes = [1, 256], strides = [1, 1]} : vector<3x256xf32> to vector<1x256xf32>
    %4 = vector.broadcast %3 : vector<1x256xf32> to vector<32x256xf32>
    %5 = arith.mulf %4, %1 : vector<32x256xf32>
    %c1_i32 = arith.constant 1 : i32
    %6 = tpu.dynamic_rotate %1 by %c1_i32 dim 0 : vector<32x256xf32>, i32 -> vector<32x256xf32>
    %7 = vector.extract_strided_slice %2 {offsets = [0, 0], sizes = [1, 256], strides = [1, 1]} : vector<3x256xf32> to vector<1x256xf32>
    %8 = vector.broadcast %7 : vector<1x256xf32> to vector<32x256xf32>
    %9 = arith.mulf %8, %6 : vector<32x256xf32>
    %10 = arith.addf %5, %9 : vector<32x256xf32>
    %c31_i32 = arith.constant 31 : i32
    %11 = tpu.dynamic_rotate %1 by %c31_i32 dim 0 : vector<32x256xf32>, i32 -> vector<32x256xf32>
    %12 = vector.extract_strided_slice %2 {offsets = [2, 0], sizes = [1, 256], strides = [1, 1]} : vector<3x256xf32> to vector<1x256xf32>
    %13 = vector.broadcast %12 : vector<1x256xf32> to vector<32x256xf32>
    %14 = arith.mulf %13, %11 : vector<32x256xf32>
    %15 = arith.addf %10, %14 : vector<32x256xf32>
    %c0_4 = arith.constant 0 : index
    %c0_5 = arith.constant 0 : index
    %c0_6 = arith.constant 0 : index
    %16 = vector.load %arg4[%c0_4, %c0_5, %c0_6] : memref<1x32x256xf32, #tpu.memory_space<vmem>>, vector<1x32x256xf32>
    %17 = vector.shape_cast %16 : vector<1x32x256xf32> to vector<32x256xf32>
    %18 = vector.shape_cast %15 : vector<32x256xf32> to vector<1x32x256xf32>
    tpu.vector_store %arg4[%c0_4, %c0_5, %c0_6], %18 {strides = array<i32>} : memref<1x32x256xf32, #tpu.memory_space<vmem>>, vector<1x32x256xf32>,
    %19 = vector.extract_strided_slice %2 {offsets = [0, 0], sizes = [1, 256], strides = [1, 1]} : vector<3x256xf32> to vector<1x256xf32>
    %20 = vector.extract_strided_slice %1 {offsets = [31, 0], sizes = [1, 256], strides = [1, 1]} : vector<32x256xf32> to vector<1x256xf32>
    %21 = arith.mulf %19, %20 : vector<1x256xf32>
    %22 = vector.extract_strided_slice %2 {offsets = [2, 0], sizes = [1, 256], strides = [1, 1]} : vector<3x256xf32> to vector<1x256xf32>
    %23 = vector.extract_strided_slice %1 {offsets = [0, 0], sizes = [1, 256], strides = [1, 1]} : vector<32x256xf32> to vector<1x256xf32>
    %24 = arith.mulf %22, %23 : vector<1x256xf32>
    %25 = vector.extract_strided_slice %15 {offsets = [0, 0], sizes = [1, 256], strides = [1, 1]} : vector<32x256xf32> to vector<1x256xf32>
    %26 = arith.subf %25, %21 : vector<1x256xf32>
    %c0_7 = arith.constant 0 : index
    %c0_8 = arith.constant 0 : index
    %c0_9 = arith.constant 0 : index
    %27 = vector.load %arg4[%c0_7, %c0_8, %c0_9] : memref<1x32x256xf32, #tpu.memory_space<vmem>>, vector<1x1x256xf32>
    %28 = vector.shape_cast %27 : vector<1x1x256xf32> to vector<1x256xf32>
    %29 = vector.shape_cast %26 : vector<1x256xf32> to vector<1x1x256xf32>
    tpu.vector_store %arg4[%c0_7, %c0_8, %c0_9], %29 {strides = array<i32>} : memref<1x32x256xf32, #tpu.memory_space<vmem>>, vector<1x1x256xf32>,
    %30 = vector.extract_strided_slice %15 {offsets = [31, 0], sizes = [1, 256], strides = [1, 1]} : vector<32x256xf32> to vector<1x256xf32>
    %31 = arith.subf %30, %24 : vector<1x256xf32>
    %c0_10 = arith.constant 0 : index
    %c31 = arith.constant 31 : index
    %c0_11 = arith.constant 0 : index
    %32 = vector.load %arg4[%c0_10, %c31, %c0_11] : memref<1x32x256xf32, #tpu.memory_space<vmem>>, vector<1x1x256xf32>
    %33 = vector.shape_cast %32 : vector<1x1x256xf32> to vector<1x256xf32>
    %34 = vector.shape_cast %31 : vector<1x256xf32> to vector<1x1x256xf32>
    tpu.vector_store %arg4[%c0_10, %c31, %c0_11], %34 {strides = array<i32>} : memref<1x32x256xf32, #tpu.memory_space<vmem>>, vector<1x1x256xf32>,
    return
  }
  func.func @transform_0(%arg0: i32, %arg1: i32) -> (i32, i32, i32) {
    %c0_i32 = arith.constant 0 : i32
    %c0_i32_0 = arith.constant 0 : i32
    return %arg1, %c0_i32, %arg0 : i32, i32, i32
  }
  func.func @transform_1(%arg0: i32, %arg1: i32) -> (i32, i32) {
    %c0_i32 = arith.constant 0 : i32
    %c0_i32_0 = arith.constant 0 : i32
    return %c0_i32, %arg0 : i32, i32
  }
  func.func @transform_2(%arg0: i32, %arg1: i32) -> (i32, i32, i32) {
    %c0_i32 = arith.constant 0 : i32
    %c0_i32_0 = arith.constant 0 : i32
    return %arg1, %c0_i32, %arg0 : i32, i32, i32
  }
}

</mosaic_0001>

<llo_original>
// kernel: channel_enhance_2.1
$region0: #{channel_enhance_2.1}
  #allocation0 [shape = 'u32[]', space=smem, size = 0x4, offset = 0x4, fixed_abs, tag = 'smem constant byte address 0x4 - core index']
  #allocation1 [shape = 'u32[144,128]{1,0:T(1,128)}', space=vmem, size = 0x12000, scoped, tag = 'internal scratch']
  %s0 = inlined_call_operand.vmem [shape: f32[2,32,256], index: 0, kind: input, shape index: {}, may-alias: {0,2}]
  %s1 = inlined_call_operand.vmem [shape: f32[3,256], index: 1, kind: input, shape index: {}]
  %s2 = inlined_call_operand.vmem [shape: f32[2,32,256], index: 2, kind: output, shape index: {}, may-alias: {0,2}]
  %s3 = sld [smem:[#allocation0]]
  $region41: #{channel_enhance_2.1} parent=0
    _
  %s5 = ssub.s32 1, %s3
  %s6 = scalar_select 0, %s5, %s3
  loop: start=0, step=1, limit=4
  $region2: #{channel_enhance_2.1} parent=0 // loop_pre_header
    _
  $region3: #{channel_enhance_2.1} parent=0 // loop_header
    %s8 = sphi 0, %s12
    %p9 = scmp.ge.s32.totalorder %s8, 4
    %s15 = sphi 0, %s27
    %s16 = sphi 0, %s23
    %s17 = sphi 0, %s15
    %s18 = sphi 0, %s16
    %s19 = sphi 0, %s17
    %s20 = sphi 0, %s18
    %s32 = sphi 0, %s34
    %s35 = sphi 0, %s32
    %s36 = sphi 0, %s35
    %s52 = sphi 0, %s36
    %s58 = sphi 0, %s60
    %s61 = sphi 0, %s58
    %s62 = sphi 0, %s61
    %s78 = sphi 0, %s62
    %s86 = sphi 0, %s88
    %s89 = sphi 0, %s86
    %s90 = sphi 0, %s89
    %s106 = sphi 0, %s90
  $region4: #{channel_enhance_2.1} parent=0 // loop_header_branch
    %11 = sbr.rel (%p9) target = $region8
  $region5: #{channel_enhance_2.1} parent=0 // loop_body
    %s13 = ssub.s32 %s8, 1
    %s14 = ssub.s32 %s8, 2
    %s21 = sadd.s32 1, %s16
    %p22 = scmp.ge.s32.totalorder %s21, 2
    %s23 = scalar_select %p22, 0, %s21
    %s24 = sadd.s32 1, %s15
    %s25 = scalar_select %p22, %s24, %s15
    %p26 = scmp.ge.s32.totalorder %s25, 1
    %s27 = scalar_select %p26, 0, %s25
    %s28 = ssub.s32 %s16, %s23
    %s29 = ssub.s32 %s15, %s27
    %s30 = sor.u32 %s28, %s29
    %p31 = scmp.eq.s32.totalorder %s30, 0
    %s33 = sadd.s32 %s32, 1
    %s34 = scalar_select %p31, %s32, %s33
    %p37 = pneg %p31
    %p38 = scmp.eq.s32.totalorder %s8, 1
    %p39 = por %p37, %p38
    %p40 = scmp.ne.s32.totalorder %s32, %s35
    %p41 = scmp.eq.s32.totalorder %s8, 0
    %p42 = por %p40, %p41
    %p43 = scmp.ne.s32.totalorder %s32, %s35
    %p44 = scmp.eq.s32.totalorder %s13, 1
    %p45 = por %p43, %p44
    %p46 = scmp.ne.s32.totalorder %s35, %s36
    %p47 = scmp.eq.s32.totalorder %s13, 0
    %p48 = por %p46, %p47
    %p49 = scmp.ne.s32.totalorder %s35, %s36
    %p50 = scmp.eq.s32.totalorder %s14, 1
    %p51 = por %p49, %p50
    %p53 = scmp.ne.s32.totalorder %s36, %s52
    %p54 = scmp.eq.s32.totalorder %s14, 0
    %p55 = por %p53, %p54
    %s56 = ssub.s32 %s15, %s27
    %p57 = scmp.eq.s32.totalorder %s56, 0
    %s59 = sadd.s32 %s58, 1
    %s60 = scalar_select %p57, %s58, %s59
    %p63 = pneg %p57
    %p64 = scmp.eq.s32.totalorder %s8, 1
    %p65 = por %p63, %p64
    %p66 = scmp.ne.s32.totalorder %s58, %s61
    %p67 = scmp.eq.s32.totalorder %s8, 0
    %p68 = por %p66, %p67
    %p69 = scmp.ne.s32.totalorder %s58, %s61
    %p70 = scmp.eq.s32.totalorder %s13, 1
    %p71 = por %p69, %p70
    %p72 = scmp.ne.s32.totalorder %s61, %s62
    %p73 = scmp.eq.s32.totalorder %s13, 0
    %p74 = por %p72, %p73
    %p75 = scmp.ne.s32.totalorder %s61, %s62
    %p76 = scmp.eq.s32.totalorder %s14, 1
    %p77 = por %p75, %p76
    %p79 = scmp.ne.s32.totalorder %s62, %s78
    %p80 = scmp.eq.s32.totalorder %s14, 0
    %p81 = por %p79, %p80
    %s82 = ssub.s32 %s16, %s23
    %s83 = ssub.s32 %s15, %s27
    %s84 = sor.u32 %s82, %s83
    %p85 = scmp.eq.s32.totalorder %s84, 0
    %s87 = sadd.s32 %s86, 1
    %s88 = scalar_select %p85, %s86, %s87
    %p91 = pneg %p85
    %p92 = scmp.eq.s32.totalorder %s8, 1
    %p93 = por %p91, %p92
    %p94 = scmp.ne.s32.totalorder %s86, %s89
    %p95 = scmp.eq.s32.totalorder %s8, 0
    %p96 = por %p94, %p95
    %p97 = scmp.ne.s32.totalorder %s86, %s89
    %p98 = scmp.eq.s32.totalorder %s13, 1
    %p99 = por %p97, %p98
    %p100 = scmp.ne.s32.totalorder %s89, %s90
    %p101 = scmp.eq.s32.totalorder %s13, 0
    %p102 = por %p100, %p101
    %p103 = scmp.ne.s32.totalorder %s89, %s90
    %p104 = scmp.eq.s32.totalorder %s14, 1
    %p105 = por %p103, %p104
    %p107 = scmp.ne.s32.totalorder %s90, %s106
    %p108 = scmp.eq.s32.totalorder %s14, 0
    %p109 = por %p107, %p108
    %p110 = scmp.le.s32.totalorder 1, %s8
    %p111 = scmp.lt.s32.totalorder %s8, 3
    %p112 = pnand %p110, %p111
    %p113 = pneg %p112
    // Predicated region
    $region9: #{channel_enhance_2.1} parent=5 // pred_check
      _
    $region10: #{channel_enhance_2.1} parent=5 // pred_check_branch
      %115 = sbr.rel (%p112) target = $region12
    $region11: #{channel_enhance_2.1} parent=5 // pred_region
      %s116 = ssub.s32 %s8, 1
      // Predicated region
      $region13: #{channel_enhance_2.1} parent=11 // pred_check
        %p117 = pneg %p74
      $region14: #{channel_enhance_2.1} parent=11 // pred_check_branch
        %119 = sbr.rel (%p117) target = $region16
      $region15: #{channel_enhance_2.1} parent=11 // pred_region
        %s120 = smul.u32 2, %s17
        %p121 = scmp.lt.s32.totalorder %s120, 1
        %s122 = scalar_select %p121, %s120, 1
        %s123 = smul.addr %s122, 4
        %s124 = scalar_lea.vmem %s1, %s123
        %s125 = smul.u32 2, %s17
      $region16: #{channel_enhance_2.1} parent=11 // pred_fallthru
        _
    $region12: #{channel_enhance_2.1} parent=5 // pred_fallthru
      _
    %p126 = scmp.lt.s32.totalorder %s8, 2
    // Predicated region
    $region17: #{channel_enhance_2.1} parent=5 // pred_check
      %p127 = pneg %p126
    $region18: #{channel_enhance_2.1} parent=5 // pred_check_branch
      %129 = sbr.rel (%p127) target = $region20
    $region19: #{channel_enhance_2.1} parent=5 // pred_region
      // Predicated region
      $region21: #{channel_enhance_2.1} parent=19 // pred_check
        %p130 = pneg %p42
      $region22: #{channel_enhance_2.1} parent=19 // pred_check_branch
        %132 = sbr.rel (%p130) target = $region24
      $region23: #{channel_enhance_2.1} parent=19 // pred_region
        %s133 = smul.u32 2, %s15
        %p134 = scmp.lt.s32.totalorder %s16, 1
        %s135 = scalar_select %p134, %s16, 1
        %p136 = scmp.lt.s32.totalorder %s133, 1
        %s137 = scalar_select %p136, %s133, 1
        %s138 = smul.addr %s135, 8
        %s139 = sadd.s32 %s137, %s138
        %s140 = smul.addr %s139, 8
        %s141 = scalar_lea.vmem %s0, %s140
        %s142 = smul.u32 2, %s15
      $region24: #{channel_enhance_2.1} parent=19 // pred_fallthru
        _
    $region20: #{channel_enhance_2.1} parent=5 // pred_fallthru
      _
    %p143 = scmp.le.s32.totalorder 1, %s8
    %p144 = scmp.lt.s32.totalorder %s8, 3
    %p145 = pnand %p143, %p144
    %p146 = pneg %p145
    // Predicated region
    $region25: #{channel_enhance_2.1} parent=5 // pred_check
      _
    $region26: #{channel_enhance_2.1} parent=5 // pred_check_branch
      %148 = sbr.rel (%p145) target = $region28
    $region27: #{channel_enhance_2.1} parent=5 // pred_region
      %s149 = ssub.s32 %s8, 1
      %s150 = smul.u32 2, %s17
      %p151 = scmp.lt.s32.totalorder %s18, 1
      %s152 = scalar_select %p151, %s18, 1
      %p153 = scmp.lt.s32.totalorder %s150, 1
      %s154 = scalar_select %p153, %s150, 1
      %s155 = smul.addr %s152, 8
      %s156 = sadd.s32 %s154, %s155
      %s157 = smul.addr %s156, 8
      %s158 = scalar_lea.vmem %s0, %s157
      %p159 = pneg %p48
      %p160 = pneg %p45
      %s161 = smul.u32 2, %s17
      %p162 = scmp.lt.s32.totalorder %s161, 1
      %s163 = scalar_select %p162, %s161, 1
      %s164 = smul.addr %s163, 4
      %s165 = scalar_lea.vmem %s1, %s164
      %p166 = pneg %p74
      %p167 = pneg %p71
      %p168 = pneg %p102
      %p169 = pneg %p99
      %s170 = smul.u32 2, %s17
      %p171 = scmp.lt.s32.totalorder %s18, 1
      %s172 = scalar_select %p171, %s18, 1
      %p173 = scmp.lt.s32.totalorder %s170, 1
      %s174 = scalar_select %p173, %s170, 1
      %s175 = smul.addr %s172, 8
      %s176 = sadd.s32 %s174, %s175
      %s177 = smul.addr %s176, 8
      %s178 = scalar_lea.vmem %s2, %s177
      %s179 = smul.u32 2, %s17
      %p180 = scmp.lt.s32.totalorder %s18, 1
      %s181 = scalar_select %p180, %s18, 1
      %p182 = scmp.lt.s32.totalorder %s179, 1
      %s183 = scalar_select %p182, %s179, 1
      %s184 = smul.addr %s181, 8
      %s185 = sadd.s32 %s183, %s184
      %s186 = smul.addr %s185, 8
      %s187 = scalar_lea.vmem %s0, %s186
      %s188 = smul.u32 2, %s17
      %s189 = smul.u32 2, %s17
      %p190 = scmp.lt.s32.totalorder %s189, 1
      %s191 = scalar_select %p190, %s189, 1
      %s192 = smul.addr %s191, 4
      %s193 = scalar_lea.vmem %s1, %s192
      %s194 = smul.u32 2, %s17
      %s195 = smul.u32 2, %s17
      %p196 = scmp.lt.s32.totalorder %s18, 1
      %s197 = scalar_select %p196, %s18, 1
      %p198 = scmp.lt.s32.totalorder %s195, 1
      %s199 = scalar_select %p198, %s195, 1
      %s200 = smul.addr %s197, 8
      %s201 = sadd.s32 %s199, %s200
      %s202 = smul.addr %s201, 8
      %s203 = scalar_lea.vmem %s2, %s202
      %s204 = smul.u32 2, %s17
      %v205 = vld [vmem:[%s187] sm:$0xff]
      %v206 = vld [vmem:[%s187 + $0x8] sm:$0xff]
      %v207 = vld [vmem:[%s187 + $0x10] sm:$0xff]
      %v208 = vld [vmem:[%s187 + $0x18] sm:$0xff]
      %v209 = vld [vmem:[%s187 + $0x20] sm:$0xff]
      %v210 = vld [vmem:[%s187 + $0x28] sm:$0xff]
      %v211 = vld [vmem:[%s187 + $0x30] sm:$0xff]
      %v212 = vld [vmem:[%s187 + $0x38] sm:$0xff]
      %v213 = vld [vmem:[%s193] sm:$0x77]
      %v215 = vlaneseq
      %v216 = vshrl.u32 %v215, 7
      %v217 = vsub.s32 1, %v216
      %v218 = vrot.slane %v213, %v217
      %v219 = vlaneseq
      %v220 = vshrl.u32 %v219, 7
      %v221 = vsub.s32 5, %v220
      %v222 = vrot.slane %v213, %v221
      %v225 = vlaneseq
      %v226 = vshrl.u32 %v225, 7
      %v227 = vsub.s32 1, %v226
      %v228 = vrot.slane %v218, %v227
      %v229 = vlaneseq
      %v230 = vshrl.u32 %v229, 7
      %v231 = vsub.s32 1, %v230
      %v232 = vrot.slane %v222, %v231
      %v233 = vmul.f32 %v228, %v205
      %v234 = vmul.f32 %v232, %v206
      %v235 = vmul.f32 %v228, %v207
      %v236 = vmul.f32 %v232, %v208
      %v237 = vmul.f32 %v228, %v209
      %v238 = vmul.f32 %v232, %v210
      %v239 = vmul.f32 %v228, %v211
      %v240 = vmul.f32 %v232, %v212
      %v241 = vrot.slane %v205, 7
      %v242 = vrot.slane %v206, 7
      %v243 = vrot.slane %v207, 7
      %v244 = vrot.slane %v208, 7
      %v245 = vrot.slane %v209, 7
      %v246 = vrot.slane %v210, 7
      %v247 = vrot.slane %v211, 7
      %v248 = vrot.slane %v212, 7
      %v249 = vlaneseq
      %v250 = vshrl.u32 %v249, 7
      %vm251 = vcmp.lt.s32.totalorder %v250, 1
      %v252 = vsel %vm251, %v245, %v247
      %v253 = vsel %vm251, %v246, %v248
      %v254 = vsel %vm251, %v243, %v245
      %v255 = vsel %vm251, %v244, %v246
      %v256 = vsel %vm251, %v241, %v243
      %v257 = vsel %vm251, %v242, %v244
      %v258 = vsel %vm251, %v247, %v241
      %v259 = vsel %vm251, %v248, %v242
      %v260 = vlaneseq
      %v261 = vshrl.u32 %v260, 7
      %v262 = vsub.s32 0, %v261
      %v263 = vrot.slane %v213, %v262
      %v264 = vlaneseq
      %v265 = vshrl.u32 %v264, 7
      %v266 = vsub.s32 4, %v265
      %v267 = vrot.slane %v213, %v266
      %v270 = vlaneseq
      %v271 = vshrl.u32 %v270, 7
      %v272 = vsub.s32 0, %v271
      %v273 = vrot.slane %v263, %v272
      %v274 = vlaneseq
      %v275 = vshrl.u32 %v274, 7
      %v276 = vsub.s32 0, %v275
      %v277 = vrot.slane %v267, %v276
      %v278 = vmul.f32 %v273, %v258
      %v279 = vmul.f32 %v277, %v259
      %v280 = vmul.f32 %v273, %v256
      %v281 = vmul.f32 %v277, %v257
      %v282 = vmul.f32 %v273, %v254
      %v283 = vmul.f32 %v277, %v255
      %v284 = vmul.f32 %v273, %v252
      %v285 = vmul.f32 %v277, %v253
      %v286 = vadd.f32 %v233, %v278
      %v287 = vadd.f32 %v234, %v279
      %v288 = vadd.f32 %v235, %v280
      %v289 = vadd.f32 %v236, %v281
      %v290 = vadd.f32 %v237, %v282
      %v291 = vadd.f32 %v238, %v283
      %v292 = vadd.f32 %v239, %v284
      %v293 = vadd.f32 %v240, %v285
      %v294 = vrot.slane %v205, 1
      %v295 = vrot.slane %v206, 1
      %v296 = vrot.slane %v207, 1
      %v297 = vrot.slane %v208, 1
      %v298 = vrot.slane %v209, 1
      %v299 = vrot.slane %v210, 1
      %v300 = vrot.slane %v211, 1
      %v301 = vrot.slane %v212, 1
      %vm302 = vcmp.lt.s32.totalorder %v250, 7
      %v303 = vsel %vm302, %v298, %v300
      %v304 = vsel %vm302, %v299, %v301
      %v305 = vsel %vm302, %v296, %v298
      %v306 = vsel %vm302, %v297, %v299
      %v307 = vsel %vm302, %v294, %v296
      %v308 = vsel %vm302, %v295, %v297
      %v309 = vsel %vm302, %v300, %v294
      %v310 = vsel %vm302, %v301, %v295
      %v311 = vlaneseq
      %v312 = vshrl.u32 %v311, 7
      %v313 = vsub.s32 2, %v312
      %v314 = vrot.slane %v213, %v313
      %v315 = vlaneseq
      %v316 = vshrl.u32 %v315, 7
      %v317 = vsub.s32 6, %v316
      %v318 = vrot.slane %v213, %v317
      %v321 = vlaneseq
      %v322 = vshrl.u32 %v321, 7
      %v323 = vsub.s32 2, %v322
      %v324 = vrot.slane %v314, %v323
      %v325 = vlaneseq
      %v326 = vshrl.u32 %v325, 7
      %v327 = vsub.s32 2, %v326
      %v328 = vrot.slane %v318, %v327
      %v329 = vmul.f32 %v324, %v307
      %v330 = vmul.f32 %v328, %v308
      %v331 = vmul.f32 %v324, %v305
      %v332 = vmul.f32 %v328, %v306
      %v333 = vmul.f32 %v324, %v303
      %v334 = vmul.f32 %v328, %v304
      %v335 = vmul.f32 %v324, %v309
      %v336 = vmul.f32 %v328, %v310
      %v337 = vadd.f32 %v286, %v329
      %v338 = vadd.f32 %v287, %v330
      %v339 = vadd.f32 %v288, %v331
      %v340 = vadd.f32 %v289, %v332
      %v341 = vadd.f32 %v290, %v333
      %v342 = vadd.f32 %v291, %v334
      %v343 = vadd.f32 %v292, %v335
      %v344 = vadd.f32 %v293, %v336
      %345 = vst [vmem:[%s203] sm:$0xff] %v337
      %346 = vst [vmem:[%s203 + $0x8] sm:$0xff] %v338
      %347 = vst [vmem:[%s203 + $0x10] sm:$0xff] %v339
      %348 = vst [vmem:[%s203 + $0x18] sm:$0xff] %v340
      %349 = vst [vmem:[%s203 + $0x20] sm:$0xff] %v341
      %350 = vst [vmem:[%s203 + $0x28] sm:$0xff] %v342
      %351 = vst [vmem:[%s203 + $0x30] sm:$0xff] %v343
      %352 = vst [vmem:[%s203 + $0x38] sm:$0xff] %v344
      %v355 = vcombine.high %v211, %v212
      %v356 = vrot.slane %v355, 7
      %v357 = vrot.slane %v356, 4
      %v359 = vmul.f32 %v213, %v357
      %v362 = vcombine.low %v205, %v206
      %v363 = vrot.slane %v362, 6
      %v365 = vmul.f32 %v213, %v363
      %v367 = vlaneseq
      %v368 = vshrl.u32 %v367, 7
      %v369 = vsub.s32 0, %v368
      %v370 = vrot.slane %v359, %v369
      %v371 = vlaneseq
      %v372 = vshrl.u32 %v371, 7
      %v373 = vsub.s32 4, %v372
      %v374 = vrot.slane %v359, %v373
      %v377 = vsub.f32 %v337, %v370
      %v378 = vsub.f32 %v338, %v374
      %v381 = vcombine.low %v377, %v378
      %v383 = vunpack.c.l.s4 1966171168
      %v384 = vunpack.c.0.s8 %v383
      %v385 = vlaneseq
      %v386 = vshrl.u32 %v385, 7
      %v387 = vsub.s32 %v384, %v386
      %v388 = vrot.slane %v381, %v387
      %v390 = vunpack.c.l.s4 1966171168
      %v391 = vunpack.c.0.s8 %v390
      %v392 = vlaneseq
      %v393 = vshrl.u32 %v392, 7
      %v394 = vsub.s32 %v391, %v393
      %v395 = vrot.slane %v388, %v394
      %v397 = vlaneseq
      %vm398 = vcmp.ge.s32.totalorder %v397, 0
      %vm399 = vcmp.lt.s32.totalorder %v397, 256
      %vm400 = vmand %vm398, %vm399
      %401 = vst.msk [vmem:[%s203] ss:$8 sm:$0x3] %vm400, %v395
      %402 = vst.msk [vmem:[%s203] ss:$8 sm:$0x0] %vm400, %v395
      %v404 = vlaneseq
      %v405 = vshrl.u32 %v404, 7
      %v406 = vsub.s32 2, %v405
      %v407 = vrot.slane %v365, %v406
      %v408 = vlaneseq
      %v409 = vshrl.u32 %v408, 7
      %v410 = vsub.s32 6, %v409
      %v411 = vrot.slane %v365, %v410
      %v414 = vsub.f32 %v343, %v407
      %v415 = vsub.f32 %v344, %v411
      %v418 = vcombine.high %v414, %v415
      %v420 = vunpack.c.l.s4 1966171168
      %v421 = vunpack.c.0.s8 %v420
      %v422 = vlaneseq
      %v423 = vshrl.u32 %v422, 7
      %v424 = vsub.s32 %v421, %v423
      %v425 = vrot.slane %v418, %v424
      %v426 = vcombine.high %v425, %v425
      %v428 = vunpack.c.l.s4 1966171168
      %v429 = vunpack.c.0.s8 %v428
      %v430 = vlaneseq
      %v431 = vshrl.u32 %v430, 7
      %v432 = vsub.s32 %v429, %v431
      %v433 = vrot.slane %v426, %v432
      %v434 = vcombine.high %v433, %v433
      %s436 = scalar_lea.vmem %s203, 55
      %437 = vst.msk [vmem:[%s436] ss:$8 sm:$0x3] %vm400, %v434
      %438 = vst.msk [vmem:[%s436] ss:$8 sm:$0x0] %vm400, %v434
      %s439 = smul.u32 2, %s17
      %p440 = scmp.lt.s32.totalorder %s18, 1
      %s441 = scalar_select %p440, %s18, 1
      %p442 = scmp.lt.s32.totalorder %s439, 1
      %s443 = scalar_select %p442, %s439, 1
      %s444 = smul.addr %s441, 8
      %s445 = sadd.s32 %s443, %s444
      %s446 = smul.addr %s445, 8
      %s447 = scalar_lea.vmem %s2, %s446
      // Predicated region
      $region29: #{channel_enhance_2.1} parent=27 // pred_check
        %p448 = pneg %p99
      $region30: #{channel_enhance_2.1} parent=27 // pred_check_branch
        %450 = sbr.rel (%p448) target = $region32
      $region31: #{channel_enhance_2.1} parent=27 // pred_region
        %s451 = smul.u32 2, %s17
      $region32: #{channel_enhance_2.1} parent=27 // pred_fallthru
        _
    $region28: #{channel_enhance_2.1} parent=5 // pred_fallthru
      _
    %p452 = scmp.le.s32.totalorder 2, %s8
    // Predicated region
    $region33: #{channel_enhance_2.1} parent=5 // pred_check
      %p453 = pneg %p452
    $region34: #{channel_enhance_2.1} parent=5 // pred_check_branch
      %455 = sbr.rel (%p453) target = $region36
    $region35: #{channel_enhance_2.1} parent=5 // pred_region
      %s456 = ssub.s32 %s8, 2
      // Predicated region
      $region37: #{channel_enhance_2.1} parent=35 // pred_check
        %p457 = pneg %p105
      $region38: #{channel_enhance_2.1} parent=35 // pred_check_branch
        %459 = sbr.rel (%p457) target = $region40
      $region39: #{channel_enhance_2.1} parent=35 // pred_region
        %s460 = smul.u32 2, %s19
        %p461 = scmp.lt.s32.totalorder %s20, 1
        %s462 = scalar_select %p461, %s20, 1
        %p463 = scmp.lt.s32.totalorder %s460, 1
        %s464 = scalar_select %p463, %s460, 1
        %s465 = smul.addr %s462, 8
        %s466 = sadd.s32 %s464, %s465
        %s467 = smul.addr %s466, 8
        %s468 = scalar_lea.vmem %s2, %s467
      $region40: #{channel_enhance_2.1} parent=35 // pred_fallthru
        _
    $region36: #{channel_enhance_2.1} parent=5 // pred_fallthru
      _
  $region6: #{channel_enhance_2.1} parent=0 // loop_footer
    %s12 = sadd.s32 1, %s8
  $region7: #{channel_enhance_2.1} parent=0 // loop_footer_branch
    %7 = sbr.rel target = $region3
  $region8: #{channel_enhance_2.1} parent=0 // loop_exit
    _

</llo_original>
